<compile_context>
chip_gen: v7x
topology: tpu7x:2x2x1
jax: 0.10.0
libtpu: 0.0.40
codegen_flags: <defaults>
</compile_context>

<pallas_src>
import functools

import jax
import jax.numpy as jnp
from jax.experimental import pallas as pl
from jax.experimental.pallas import tpu as pltpu


def _round_up(x, m):
    return ((x + m - 1) // m) * m


def _cdiv(a, b):
    return -(-a // b)


def _sublane_align(dtype):
    # Sublane packing: 8 rows for 4-byte, 16 for 2-byte, 32 for 1-byte dtypes.
    return {4: 8, 2: 16, 1: 32}.get(jnp.dtype(dtype).itemsize, 8)


def speaker_head_kernel(x_ref, w1_ref, b1_ref, w2_ref, b2_ref, o_ref, acc_ref,
                        *, inv_t, k_fold, d_model, last_valid_rows):
    # x_ref: (tB, tT, D_eff)  w1: (D, Hp)  b1: (1, Hp)  w2: (Hp, Hp)  b2: (1, Hp)
    # o_ref: (tB, Hp)         acc_ref: (tB, D_eff) f32 scratch (running time-sum)
    t = pl.program_id(1)
    n_t = pl.num_programs(1)
    t_tile = x_ref.shape[1]

    @pl.when(t == 0)
    def _init():
        acc_ref[...] = jnp.zeros_like(acc_ref)

    def _full_add():
        # f32 accumulation without materializing a full f32 copy of the tile.
        acc_ref[...] += jnp.sum(x_ref[...], axis=1, dtype=jnp.float32)

    if last_valid_rows == t_tile:
        # Time grid divides evenly (or single full tile): no masking needed.
        _full_add()
    else:
        @pl.when(t < n_t - 1)
        def _body():
            _full_add()

        @pl.when(t == n_t - 1)
        def _ragged():
            # Mask out-of-range time rows of the last (non-dividing) tile.
            row = jax.lax.broadcasted_iota(jnp.int32, (1, t_tile, 1), 1)
            xt = jnp.where(row < last_valid_rows, x_ref[...],
                           jnp.zeros((), x_ref.dtype))
            acc_ref[...] += jnp.sum(xt, axis=1, dtype=jnp.float32)

    @pl.when(t == n_t - 1)
    def _finalize():
        acc = acc_ref[...]                                   # (tB, k*D)
        if k_fold > 1:
            # Fold the lane-packed time groups back onto the model dim.
            pooled_sum = acc[:, 0:d_model]
            for j in range(1, k_fold):
                pooled_sum = pooled_sum + acc[:, j * d_model:(j + 1) * d_model]
        else:
            pooled_sum = acc
        # Single scale by 1/T (sum-then-scale == mean; masked rows add 0).
        pooled = pooled_sum * inv_t                          # (tB, D)

        h1 = jnp.dot(pooled, w1_ref[...],
                     preferred_element_type=jnp.float32) + b1_ref[...]
        h1 = jnp.maximum(h1, 0.0)
        h2 = jnp.dot(h1, w2_ref[...],
                     preferred_element_type=jnp.float32) + b2_ref[...]
        h2 = jnp.maximum(h2, 0.0)
        o_ref[...] = h2.astype(o_ref.dtype)


def speaker_head_forward(x, w1, b1, w2, b2, *, b_tile=256):
    B, T, D = x.shape
    H = w1.shape[1]
    dtype = x.dtype
    itemsize = jnp.dtype(dtype).itemsize
    f32 = 4

    # ---- lane folding: pack k consecutive time steps onto lanes when D < 128.
    if D < 128 and 128 % D == 0 and T % (128 // D) == 0:
        k_fold = 128 // D
    else:
        k_fold = 1
    T_eff = T // k_fold
    D_eff = D * k_fold
    x_eff = x.reshape(B, T_eff, D_eff) if k_fold > 1 else x   # free row-major view

    # ---- lane-dense hidden dim (zero pads keep math exact).
    H_pad = _round_up(H, 128)

    # ---- batch tile: at least 2 parallel tiles when B >= 16 (v7x has 2 TCs).
    if B >= 16:
        tB = max(8, min(b_tile, _round_up(_cdiv(B, 2), 8)))
    else:
        tB = _round_up(max(B, 1), 8)

    # ---- generation-aware VMEM budgeting (v7x: 64 MiB/TC; v5e/v6e: 128 MiB).
    try:
        vmem_cap = int(pltpu.get_tpu_info().vmem_capacity_bytes)
    except Exception:
        vmem_cap = 64 << 20                       # conservative (v7x) fallback
    total_cap = min((vmem_cap * 3) // 4, 96 << 20)

    sub = _sublane_align(dtype)
    w_bytes = f32 * (D * H_pad + H_pad + H_pad * H_pad + H_pad)

    def _non_x_bytes(tb):
        return 2 * w_bytes + 2 * f32 * tb * H_pad + f32 * tb * D_eff

    # Shrink tB if even a minimal double-buffered x tile would not fit.
    while tB > 8 and (_non_x_bytes(tB) + 2 * sub * tB * D_eff * itemsize
                      + (4 << 20)) > total_cap:
        tB = max(8, _round_up(tB // 2, 8))

    grid_b = _cdiv(B, tB)
    B_out = grid_b * tB                           # tiny padded output (sliced off)

    non_x_bytes = _non_x_bytes(tB)
    per_row_bytes = tB * D_eff * itemsize
    x_budget = max(total_cap - non_x_bytes - (4 << 20), 2 * sub * per_row_bytes)

    fit_tt = max(sub, (x_budget // (2 * per_row_bytes)) // sub * sub)
    tT = T_eff if fit_tt >= T_eff else fit_tt
    grid_t = _cdiv(T_eff, tT)
    last_rows = T_eff - (grid_t - 1) * tT

    # Deeper buffering only when tiles are small and the DMA latency is exposed.
    x_tile_bytes = tT * per_row_bytes
    use_deep = (grid_t >= 4 and x_tile_bytes < (1 << 20)
                and non_x_bytes + 3 * x_tile_bytes + (4 << 20) <= total_cap)
    n_buf = 3 if use_deep else 2

    needed = non_x_bytes + n_buf * x_tile_bytes
    vmem_limit = max(needed + (4 << 20), 32 << 20)

    # ---- tiny weight/bias padding (exact: zero columns/rows, sliced off below).
    w1_p = jnp.pad(w1, ((0, 0), (0, H_pad - H)))
    b1_p = jnp.pad(b1.reshape(1, H), ((0, 0), (0, H_pad - H)))
    w2_p = jnp.pad(w2, ((0, H_pad - H), (0, H_pad - H)))
    b2_p = jnp.pad(b2.reshape(1, H), ((0, 0), (0, H_pad - H)))

    kernel = functools.partial(
        speaker_head_kernel, inv_t=1.0 / T, k_fold=k_fold, d_model=D,
        last_valid_rows=last_rows)

    x_spec_kwargs = dict(pipeline_mode=pl.Buffered(3)) if use_deep else {}

    cost = pl.CostEstimate(
        flops=2 * B * (D * H_pad + H_pad * H_pad),
        transcendentals=0,
        bytes_accessed=B * T * D * itemsize + w_bytes + B * H_pad * f32,
    )

    out = pl.pallas_call(
        kernel,
        out_shape=jax.ShapeDtypeStruct((B_out, H_pad), jnp.float32),
        grid_spec=pltpu.PrefetchScalarGridSpec(
            num_scalar_prefetch=0,
            grid=(grid_b, grid_t),
            in_specs=[
                pl.BlockSpec((tB, tT, D_eff), lambda b, t: (b, t, 0),
                             **x_spec_kwargs),                       # x, streamed
                pl.BlockSpec((D, H_pad), lambda b, t: (0, 0)),       # w1, resident
                pl.BlockSpec((1, H_pad), lambda b, t: (0, 0)),       # b1, resident
                pl.BlockSpec((H_pad, H_pad), lambda b, t: (0, 0)),   # w2, resident
                pl.BlockSpec((1, H_pad), lambda b, t: (0, 0)),       # b2, resident
            ],
            out_specs=pl.BlockSpec((tB, H_pad), lambda b, t: (b, 0)),
            scratch_shapes=[pltpu.VMEM((tB, D_eff), jnp.float32)],
        ),
        compiler_params=pltpu.CompilerParams(
            dimension_semantics=("parallel", "arbitrary"),
            vmem_limit_bytes=int(vmem_limit),
        ),
        cost_estimate=cost,
    )(x_eff, w1_p, b1_p, w2_p, b2_p)

    return out[:B, :H]


def init_linear(key, fan_in, fan_out):
    # Deterministic init mimicking PyTorch's default Linear init (uniform ±1/sqrt(fan_in)).
    kw, kb = jax.random.split(key)
    bound = 1.0 / jnp.sqrt(fan_in)
    w = jax.random.uniform(kw, (fan_in, fan_out), jnp.float32, -bound, bound)
    b = jax.random.uniform(kb, (1, fan_out), jnp.float32, -bound, bound)
    return w, b


def reference_forward(x, w1, b1, w2, b2):
    pooled = jnp.mean(x.astype(jnp.float32), axis=1)
    h1 = jnp.maximum(pooled @ w1 + b1.reshape(1, -1), 0.0)
    return jnp.maximum(h1 @ w2 + b2.reshape(1, -1), 0.0)


if __name__ == "__main__":
    # Small shapes consistent with the module: batch=2, seq=8, input_dim=32, hidden_dim=16.
    B, T, D, H = 2, 8, 32, 16

    key = jax.random.PRNGKey(0)
    kx, k1, k2, k3 = jax.random.split(key, 4)

    x = jax.random.normal(kx, (B, T, D), jnp.float32)
    w1, b1 = init_linear(k1, D, H)
    w2, b2 = init_linear(k2, H, H)
    # TODO(synk): fc3 (Linear(H, num_speakers)) is initialized in the PyTorch module
    # but never called in forward(); intentionally omitted from the kernel.

    out = speaker_head_forward(x, w1, b1, w2, b2)
    out = jax.block_until_ready(out)

    ref = reference_forward(x, w1, b1, w2, b2)
    assert out.shape == (B, H)
    assert jnp.allclose(out, ref, atol=1e-5, rtol=1e-5)

    print("KERNEL_OK")
</pallas_src>

<mosaic_0001>
module attributes {stable_mosaic.version = 11 : i64} {
  func.func @speaker_head_kernel(%arg0: i32, %arg1: i32, %arg2: memref<8x2x128xf32, #tpu.memory_space<vmem>>, %arg3: memref<32x128xf32, #tpu.memory_space<vmem>>, %arg4: memref<1x128xf32, #tpu.memory_space<vmem>>, %arg5: memref<128x128xf32, #tpu.memory_space<vmem>>, %arg6: memref<1x128xf32, #tpu.memory_space<vmem>>, %arg7: memref<8x128xf32, #tpu.memory_space<vmem>>, %arg8: memref<8x128xf32, #tpu.memory_space<vmem>>) attributes {dimension_semantics = [#tpu.dimension_semantics<parallel>, #tpu.dimension_semantics<arbitrary>], iteration_bounds = array<i64: 1, 1>, scalar_prefetch = 0 : i64, scratch_operands = 1 : i64, tpu.core_type = #tpu.core_type<tc>, window_params = [{transform_indices = @transform_0, window_bounds = array<i64: 8, 2, 128>}, {pipeline_mode = #tpu.pipeline_mode<synchronous>, transform_indices = @transform_1, window_bounds = array<i64: 32, 128>}, {pipeline_mode = #tpu.pipeline_mode<synchronous>, transform_indices = @transform_2, window_bounds = array<i64: 1, 128>}, {pipeline_mode = #tpu.pipeline_mode<synchronous>, transform_indices = @transform_3, window_bounds = array<i64: 128, 128>}, {pipeline_mode = #tpu.pipeline_mode<synchronous>, transform_indices = @transform_4, window_bounds = array<i64: 1, 128>}, {transform_indices = @transform_5, window_bounds = array<i64: 8, 128>}]} {
    %c0_i32 = arith.constant 0 : i32
    %0 = arith.cmpi eq, %arg1, %c0_i32 : i32
    %1 = arith.extui %0 : i1 to i32
    %c0_i32_0 = arith.constant 0 : i32
    %2 = arith.cmpi ne, %1, %c0_i32_0 : i32
    scf.if %2 {
      %cst_9 = arith.constant 0.000000e+00 : f32
      %11 = vector.broadcast %cst_9 : f32 to vector<8x128xf32>
      %c0_10 = arith.constant 0 : index
      %c0_11 = arith.constant 0 : index
      %12 = vector.load %arg8[%c0_10, %c0_11] : memref<8x128xf32, #tpu.memory_space<vmem>>, vector<8x128xf32>
      tpu.vector_store %arg8[%c0_10, %c0_11], %11 {strides = array<i32>} : memref<8x128xf32, #tpu.memory_space<vmem>>, vector<8x128xf32>,
    } else {
    }
    %c0 = arith.constant 0 : index
    %c0_1 = arith.constant 0 : index
    %3 = vector.load %arg8[%c0, %c0_1] : memref<8x128xf32, #tpu.memory_space<vmem>>, vector<8x128xf32>
    %c0_2 = arith.constant 0 : index
    %c0_3 = arith.constant 0 : index
    %c0_4 = arith.constant 0 : index
    %4 = vector.load %arg2[%c0_2, %c0_3, %c0_4] : memref<8x2x128xf32, #tpu.memory_space<vmem>>, vector<8x2x128xf32>
    %cst = arith.constant dense<0.000000e+00> : vector<8x128xf32>
    %5 = vector.multi_reduction <add>, %4, %cst [1] : vector<8x2x128xf32> to vector<8x128xf32>
    %6 = arith.addf %3, %5 : vector<8x128xf32>
    %c0_5 = arith.constant 0 : index
    %c0_6 = arith.constant 0 : index
    %7 = vector.load %arg8[%c0_5, %c0_6] : memref<8x128xf32, #tpu.memory_space<vmem>>, vector<8x128xf32>
    tpu.vector_store %arg8[%c0_5, %c0_6], %6 {strides = array<i32>} : memref<8x128xf32, #tpu.memory_space<vmem>>, vector<8x128xf32>,
    %c0_i32_7 = arith.constant 0 : i32
    %8 = arith.cmpi eq, %arg1, %c0_i32_7 : i32
    %9 = arith.extui %8 : i1 to i32
    %c0_i32_8 = arith.constant 0 : i32
    %10 = arith.cmpi ne, %9, %c0_i32_8 : i32
    scf.if %10 {
      %c0_9 = arith.constant 0 : index
      %c0_10 = arith.constant 0 : index
      %11 = vector.load %arg8[%c0_9, %c0_10] : memref<8x128xf32, #tpu.memory_space<vmem>>, vector<8x128xf32>
      %12 = vector.extract_strided_slice %11 {offsets = [0, 0], sizes = [8, 32], strides = [1, 1]} : vector<8x128xf32> to vector<8x32xf32>
      %13 = vector.extract_strided_slice %11 {offsets = [0, 32], sizes = [8, 32], strides = [1, 1]} : vector<8x128xf32> to vector<8x32xf32>
      %14 = arith.addf %12, %13 : vector<8x32xf32>
      %15 = vector.extract_strided_slice %11 {offsets = [0, 64], sizes = [8, 32], strides = [1, 1]} : vector<8x128xf32> to vector<8x32xf32>
      %16 = arith.addf %14, %15 : vector<8x32xf32>
      %17 = vector.extract_strided_slice %11 {offsets = [0, 96], sizes = [8, 32], strides = [1, 1]} : vector<8x128xf32> to vector<8x32xf32>
      %18 = arith.addf %16, %17 : vector<8x32xf32>
      %cst_11 = arith.constant 1.250000e-01 : f32
      %19 = vector.broadcast %cst_11 : f32 to vector<8x32xf32>
      %20 = arith.mulf %18, %19 : vector<8x32xf32>
      %c0_12 = arith.constant 0 : index
      %c0_13 = arith.constant 0 : index
      %21 = vector.load %arg3[%c0_12, %c0_13] : memref<32x128xf32, #tpu.memory_space<vmem>>, vector<32x128xf32>
      %cst_14 = arith.constant dense<0.000000e+00> : vector<8x128xf32>
      %22 = tpu.matmul %20, %21, %cst_14 {dimension_numbers = #tpu.dot_dimension_numbers<[1], [0], [0], [1], [0, 0, 1, 1], [], []>} : vector<8x32xf32>, vector<32x128xf32>, vector<8x128xf32> -> vector<8x128xf32>
      %c0_15 = arith.constant 0 : index
      %c0_16 = arith.constant 0 : index
      %23 = vector.load %arg4[%c0_15, %c0_16] : memref<1x128xf32, #tpu.memory_space<vmem>>, vector<1x128xf32>
      %24 = vector.broadcast %23 : vector<1x128xf32> to vector<8x128xf32>
      %25 = arith.addf %22, %24 : vector<8x128xf32>
      %cst_17 = arith.constant 0.000000e+00 : f32
      %26 = vector.broadcast %cst_17 : f32 to vector<8x128xf32>
      %27 = arith.maximumf %25, %26 : vector<8x128xf32>
      %c0_18 = arith.constant 0 : index
      %c0_19 = arith.constant 0 : index
      %28 = vector.load %arg5[%c0_18, %c0_19] : memref<128x128xf32, #tpu.memory_space<vmem>>, vector<128x128xf32>
      %cst_20 = arith.constant dense<0.000000e+00> : vector<8x128xf32>
      %29 = tpu.matmul %27, %28, %cst_20 {dimension_numbers = #tpu.dot_dimension_numbers<[1], [0], [0], [1], [0, 0, 1, 1], [], []>} : vector<8x128xf32>, vector<128x128xf32>, vector<8x128xf32> -> vector<8x128xf32>
      %c0_21 = arith.constant 0 : index
      %c0_22 = arith.constant 0 : index
      %30 = vector.load %arg6[%c0_21, %c0_22] : memref<1x128xf32, #tpu.memory_space<vmem>>, vector<1x128xf32>
      %31 = vector.broadcast %30 : vector<1x128xf32> to vector<8x128xf32>
      %32 = arith.addf %29, %31 : vector<8x128xf32>
      %cst_23 = arith.constant 0.000000e+00 : f32
      %33 = vector.broadcast %cst_23 : f32 to vector<8x128xf32>
      %34 = arith.maximumf %32, %33 : vector<8x128xf32>
      %c0_24 = arith.constant 0 : index
      %c0_25 = arith.constant 0 : index
      %35 = vector.load %arg7[%c0_24, %c0_25] : memref<8x128xf32, #tpu.memory_space<vmem>>, vector<8x128xf32>
      tpu.vector_store %arg7[%c0_24, %c0_25], %34 {strides = array<i32>} : memref<8x128xf32, #tpu.memory_space<vmem>>, vector<8x128xf32>,
    } else {
    }
    return
  }
  func.func @transform_0(%arg0: i32, %arg1: i32) -> (i32, i32, i32) {
    %c0_i32 = arith.constant 0 : i32
    %c0_i32_0 = arith.constant 0 : i32
    return %arg0, %arg1, %c0_i32 : i32, i32, i32
  }
  func.func @transform_1(%arg0: i32, %arg1: i32) -> (i32, i32) {
    %c0_i32 = arith.constant 0 : i32
    %c0_i32_0 = arith.constant 0 : i32
    %c0_i32_1 = arith.constant 0 : i32
    return %c0_i32, %c0_i32_0 : i32, i32
  }
  func.func @transform_2(%arg0: i32, %arg1: i32) -> (i32, i32) {
    %c0_i32 = arith.constant 0 : i32
    %c0_i32_0 = arith.constant 0 : i32
    %c0_i32_1 = arith.constant 0 : i32
    return %c0_i32, %c0_i32_0 : i32, i32
  }
  func.func @transform_3(%arg0: i32, %arg1: i32) -> (i32, i32) {
    %c0_i32 = arith.constant 0 : i32
    %c0_i32_0 = arith.constant 0 : i32
    %c0_i32_1 = arith.constant 0 : i32
    return %c0_i32, %c0_i32_0 : i32, i32
  }
  func.func @transform_4(%arg0: i32, %arg1: i32) -> (i32, i32) {
    %c0_i32 = arith.constant 0 : i32
    %c0_i32_0 = arith.constant 0 : i32
    %c0_i32_1 = arith.constant 0 : i32
    return %c0_i32, %c0_i32_0 : i32, i32
  }
  func.func @transform_5(%arg0: i32, %arg1: i32) -> (i32, i32) {
    %c0_i32 = arith.constant 0 : i32
    %c0_i32_0 = arith.constant 0 : i32
    return %arg0, %c0_i32 : i32, i32
  }
}

</mosaic_0001>

<llo_original>
// kernel: tpu_custom_call.1
$region0: #{tpu_custom_call.1}
  #allocation0 [shape = 'u32[]', space=smem, size = 0x4, offset = 0x4, fixed_abs, tag = 'smem constant byte address 0x4 - core index']
  #allocation1 [shape = 'u32[144,128]{1,0:T(1,128)}', space=vmem, size = 0x12000, scoped, tag = 'internal scratch']
  #allocation2 [shape = 'f32[8,128]{1,0:T(8,128)}', space=vmem, size = 0x1000, scoped, tag = 'scratch operand']
  %s0 = inlined_call_operand.hbm [shape: f32[2,2,128], index: 0, kind: input, shape index: {}]
  %s1 = inlined_call_operand.hbm [shape: f32[32,128], index: 1, kind: input, shape index: {}]
  %s2 = inlined_call_operand.vmem [shape: f32[1,128], index: 2, kind: input, shape index: {}]
  %s3 = inlined_call_operand.hbm [shape: f32[128,128], index: 3, kind: input, shape index: {}]
  %s4 = inlined_call_operand.vmem [shape: f32[1,128], index: 4, kind: input, shape index: {}]
  %s5 = inlined_call_operand.hbm [shape: f32[8,128], index: 5, kind: output, shape index: {}]
  %s6 = sld [smem:[#allocation0]]
  $region50: #{tpu_custom_call.1} parent=0
    _
  %s8 = ssub.s32 1, %s6
  %s9 = scalar_select 0, %s8, %s6
  $region1: #{tpu_custom_call.1} parent=0
    #allocation3 [shape = 'u8[8192]{0}', space=vmem, size = 0x2000, scoped, tag = 'input window, operand 0, single buffered']
    #allocation4 [shape = 's32[1]{0}', space=sflag, size = 0x4, scoped, tag = 'scoped memory for tpu_custom_call.1']
    #allocation5 [shape = 's32[1]{0}', space=sflag, size = 0x4, scoped, tag = 'scoped memory for tpu_custom_call.1']
    #allocation6 [shape = 'u8[16384]{0}', space=vmem, size = 0x4000, scoped, tag = 'input window, operand 1, single buffered']
    #allocation7 [shape = 's32[1]{0}', space=sflag, size = 0x4, scoped, tag = 'scoped memory for tpu_custom_call.1']
    #allocation8 [shape = 'u8[65536]{0}', space=vmem, size = 0x10000, scoped, tag = 'input window, operand 3, single buffered']
    #allocation9 [shape = 'u8[4096]{0}', space=vmem, size = 0x1000, scoped, tag = 'output window, operand 0, single buffered']
    %10 = vsyncpa [#allocation4], 0
    %11 = vsyncpa [#allocation7], 0
    %12 = vsyncpa [#allocation5], 0
    // Predicated region
    $region2: #{tpu_custom_call.1} parent=1 // pred_check
      _
    $region3: #{tpu_custom_call.1} parent=1 // pred_check_branch
      %14 = sbr.rel (0) target = $region5
    $region4: #{tpu_custom_call.1} parent=1 // pred_region
      %s16 = ssub.s32 256, 64
      %17 = vsyncadd [#allocation4], %s16
      %s18 = sshll.u32 [#allocation3], 4
      %s19 = int_to_ptr.vmem [resolvable:$true] %s18
      %24 = dma.hbm_to_vmem [thread:$0]  %s0, 64, %s19, [#allocation4], 32, 32, 2
    $region5: #{tpu_custom_call.1} parent=1 // pred_fallthru
      _
    // Predicated region
    $region6: #{tpu_custom_call.1} parent=1 // pred_check
      _
    $region7: #{tpu_custom_call.1} parent=1 // pred_check_branch
      %26 = sbr.rel (0) target = $region9
    $region8: #{tpu_custom_call.1} parent=1 // pred_region
      %s28 = ssub.s32 512, 512
      %29 = vsyncadd [#allocation7], %s28
      %s30 = sshll.u32 [#allocation6], 4
      %s31 = int_to_ptr.vmem [resolvable:$true] %s30
      %36 = dma.hbm_to_vmem [thread:$0]  %s1, 512, %s31, [#allocation7], 128, 128, 8
    $region9: #{tpu_custom_call.1} parent=1 // pred_fallthru
      _
    // Predicated region
    $region10: #{tpu_custom_call.1} parent=1 // pred_check
      _
    $region11: #{tpu_custom_call.1} parent=1 // pred_check_branch
      %38 = sbr.rel (0) target = $region13
    $region12: #{tpu_custom_call.1} parent=1 // pred_region
      _
    $region13: #{tpu_custom_call.1} parent=1 // pred_fallthru
      _
    // Predicated region
    $region14: #{tpu_custom_call.1} parent=1 // pred_check
      _
    $region15: #{tpu_custom_call.1} parent=1 // pred_check_branch
      %40 = sbr.rel (0) target = $region17
    $region16: #{tpu_custom_call.1} parent=1 // pred_region
      %s42 = ssub.s32 2048, 2048
      %43 = vsyncadd [#allocation7], %s42
      %s44 = sshll.u32 [#allocation8], 4
      %s45 = int_to_ptr.vmem [resolvable:$true] %s44
      %50 = dma.hbm_to_vmem [thread:$0]  %s3, 2048, %s45, [#allocation7], 128, 128, 8
    $region17: #{tpu_custom_call.1} parent=1 // pred_fallthru
      _
    // Predicated region
    $region18: #{tpu_custom_call.1} parent=1 // pred_check
      _
    $region19: #{tpu_custom_call.1} parent=1 // pred_check_branch
      %52 = sbr.rel (0) target = $region21
    $region20: #{tpu_custom_call.1} parent=1 // pred_region
      _
    $region21: #{tpu_custom_call.1} parent=1 // pred_fallthru
      _
    // Predicated region
    $region22: #{tpu_custom_call.1} parent=1 // pred_check
      _
    $region23: #{tpu_custom_call.1} parent=1 // pred_check_branch
      %54 = sbr.rel (0) target = $region25
    $region24: #{tpu_custom_call.1} parent=1 // pred_region
      %55 = dma.done [#allocation4], 256
    $region25: #{tpu_custom_call.1} parent=1 // pred_fallthru
      _
    // Predicated region
    $region26: #{tpu_custom_call.1} parent=1 // pred_check
      _
    $region27: #{tpu_custom_call.1} parent=1 // pred_check_branch
      %57 = sbr.rel (0) target = $region29
    $region28: #{tpu_custom_call.1} parent=1 // pred_region
      %58 = dma.done [#allocation7], 512
    $region29: #{tpu_custom_call.1} parent=1 // pred_fallthru
      _
    // Predicated region
    $region30: #{tpu_custom_call.1} parent=1 // pred_check
      _
    $region31: #{tpu_custom_call.1} parent=1 // pred_check_branch
      %60 = sbr.rel (0) target = $region33
    $region32: #{tpu_custom_call.1} parent=1 // pred_region
      %61 = dma.done [#allocation7], 2048
    $region33: #{tpu_custom_call.1} parent=1 // pred_fallthru
      _
    %p62 = scmp.eq.s32.totalorder 0, 0
    // Predicated region
    $region34: #{tpu_custom_call.1} parent=1 // pred_check
      %p63 = pneg %p62
    $region35: #{tpu_custom_call.1} parent=1 // pred_check_branch
      %65 = sbr.rel (%p63) target = $region37
    $region36: #{tpu_custom_call.1} parent=1 // pred_region
      %66 = vst [vmem:[#allocation2] sm:$0xff] 0.0
    $region37: #{tpu_custom_call.1} parent=1 // pred_fallthru
      _
    %v67 = vld [vmem:[#allocation2] sm:$0xff]
    %v68 = vld [vmem:[#allocation3] sm:$0x3]
    %v69 = vld [vmem:[#allocation3 + $0x2] sm:$0x3]
    %v70 = vld [vmem:[#allocation3 + $0x4] sm:$0x3]
    %v71 = vld [vmem:[#allocation3 + $0x6] sm:$0x3]
    %v72 = vld [vmem:[#allocation3 + $0x8] sm:$0x3]
    %v73 = vld [vmem:[#allocation3 + $0xa] sm:$0x3]
    %v74 = vld [vmem:[#allocation3 + $0xc] sm:$0x3]
    %v75 = vld [vmem:[#allocation3 + $0xe] sm:$0x3]
    %vm76 = vcmask 1041408
    %v77 = vsel %vm76, %v68, 0.0
    %v78 = vrot.slane %v77, 4
    %v79 = vadd.f32 %v77, %v78
    %v80 = vrot.slane %v79, 2
    %v81 = vadd.f32 %v79, %v80
    %v82 = vrot.slane %v81, 1
    %v83 = vadd.f32 %v81, %v82
    %v84 = vsel %vm76, %v69, 0.0
    %v85 = vrot.slane %v84, 4
    %v86 = vadd.f32 %v84, %v85
    %v87 = vrot.slane %v86, 2
    %v88 = vadd.f32 %v86, %v87
    %v89 = vrot.slane %v88, 1
    %v90 = vadd.f32 %v88, %v89
    %v91 = vsel %vm76, %v70, 0.0
    %v92 = vrot.slane %v91, 4
    %v93 = vadd.f32 %v91, %v92
    %v94 = vrot.slane %v93, 2
    %v95 = vadd.f32 %v93, %v94
    %v96 = vrot.slane %v95, 1
    %v97 = vadd.f32 %v95, %v96
    %v98 = vsel %vm76, %v71, 0.0
    %v99 = vrot.slane %v98, 4
    %v100 = vadd.f32 %v98, %v99
    %v101 = vrot.slane %v100, 2
    %v102 = vadd.f32 %v100, %v101
    %v103 = vrot.slane %v102, 1
    %v104 = vadd.f32 %v102, %v103
    %v105 = vsel %vm76, %v72, 0.0
    %v106 = vrot.slane %v105, 4
    %v107 = vadd.f32 %v105, %v106
    %v108 = vrot.slane %v107, 2
    %v109 = vadd.f32 %v107, %v108
    %v110 = vrot.slane %v109, 1
    %v111 = vadd.f32 %v109, %v110
    %v112 = vsel %vm76, %v73, 0.0
    %v113 = vrot.slane %v112, 4
    %v114 = vadd.f32 %v112, %v113
    %v115 = vrot.slane %v114, 2
    %v116 = vadd.f32 %v114, %v115
    %v117 = vrot.slane %v116, 1
    %v118 = vadd.f32 %v116, %v117
    %v119 = vsel %vm76, %v74, 0.0
    %v120 = vrot.slane %v119, 4
    %v121 = vadd.f32 %v119, %v120
    %v122 = vrot.slane %v121, 2
    %v123 = vadd.f32 %v121, %v122
    %v124 = vrot.slane %v123, 1
    %v125 = vadd.f32 %v123, %v124
    %v126 = vsel %vm76, %v75, 0.0
    %v127 = vrot.slane %v126, 4
    %v128 = vadd.f32 %v126, %v127
    %v129 = vrot.slane %v128, 2
    %v130 = vadd.f32 %v128, %v129
    %v131 = vrot.slane %v130, 1
    %v132 = vadd.f32 %v130, %v131
    %vm141 = vcmask 1041409
    %v142 = vsel %vm141, %v90, %v83
    %vm143 = vcmask 1042434
    %v144 = vsel %vm143, %v97, %v142
    %vm145 = vcmask 1043459
    %v146 = vsel %vm145, %v104, %v144
    %vm147 = vcmask 1044484
    %v148 = vsel %vm147, %v111, %v146
    %vm149 = vcmask 1045509
    %v150 = vsel %vm149, %v118, %v148
    %vm151 = vcmask 1046534
    %v152 = vsel %vm151, %v125, %v150
    %vm153 = vcmask 1047559
    %v154 = vsel %vm153, %v132, %v152
    %v156 = vadd.f32 %v67, %v154
    %157 = vst [vmem:[#allocation2] sm:$0xff] %v156
    // Predicated region
    $region38: #{tpu_custom_call.1} parent=1 // pred_check
      %p158 = pneg %p62
    $region39: #{tpu_custom_call.1} parent=1 // pred_check_branch
      %160 = sbr.rel (%p158) target = $region41
    $region40: #{tpu_custom_call.1} parent=1 // pred_region
      %v161 = vld [vmem:[#allocation2] sm:$0xff]
      %163 = vrot.lane.b32.xlu0 %v161, 96
      %v164 = vpop.permute.xlu0 %163
      %v166 = vadd.f32 %v161, %v164
      %167 = vrot.lane.b32.xlu0 %v161, 64
      %v168 = vpop.permute.xlu0 %167
      %v170 = vadd.f32 %v166, %v168
      %171 = vrot.lane.b32.xlu0 %v161, 32
      %v172 = vpop.permute.xlu0 %171
      %v174 = vadd.f32 %v170, %v172
      %v175 = vmul.f32 %v174, 0.125
      %v176 = vld [vmem:[#allocation6] sm:$0xff]
      %v177 = vld [vmem:[#allocation6 + $0x8] sm:$0xff]
      %v178 = vld [vmem:[#allocation6 + $0x10] sm:$0xff]
      %v179 = vld [vmem:[#allocation6 + $0x18] sm:$0xff]
      %v180 = vld [vmem:[%s2] sm:$0x1]
      %v182 = vlaneseq
      %v183 = vshrl.u32 %v182, 7
      %v184 = vsub.s32 0, %v183
      %v185 = vrot.slane %v180, %v184
      %vm187 = vcmask 261120
      %v189 = vsel %vm187, %v175, 0
      %191 = vmatprep.subr.mxu0 0.0
      %192 = vmatpush1.msra.mxu0 %v176
      %193 = vmatprep.subr.mxu0 0.0
      %194 = vmatpush1.msra.mxu0 %v177
      %195 = vmatprep.subr.mxu0 0.0
      %196 = vmatpush1.msra.mxu0 %v178
      %197 = vmatprep.subr.mxu0 0.0
      %198 = vmatpush1.msra.mxu0 %v179
      %199 = vmatprep.subr.mxu0 0.0
      %200 = vmatpush1.msra.mxu0 0.0
      %201 = vmatprep.subr.mxu0 0.0
      %202 = vmatpush1.msra.mxu0 0.0
      %203 = vmatprep.subr.mxu0 0.0
      %204 = vmatpush1.msra.mxu0 0.0
      %205 = vmatprep.subr.mxu0 0.0
      %206 = vmatpush1.msra.mxu0 0.0
      %207 = vmatprep.subr.mxu0 0.0
      %208 = vmatpush1.msra.mxu0 0.0
      %209 = vmatprep.subr.mxu0 0.0
      %210 = vmatpush1.msra.mxu0 0.0
      %211 = vmatprep.subr.mxu0 0.0
      %212 = vmatpush1.msra.mxu0 0.0
      %213 = vmatprep.subr.mxu0 0.0
      %214 = vmatpush1.msra.mxu0 0.0
      %215 = vmatprep.subr.mxu0 0.0
      %216 = vmatpush1.msra.mxu0 0.0
      %217 = vmatprep.subr.mxu0 0.0
      %218 = vmatpush1.msra.mxu0 0.0
      %219 = vmatprep.subr.mxu0 0.0
      %220 = vmatpush1.msra.mxu0 0.0
      %221 = vmatprep.subr.mxu0 0.0
      %222 = vmatpush1.msra.mxu0 0.0
      %223 = vmatprep.subr.mxu0 0.0
      %224 = vmatpush1.msra.mxu0 0.0
      %225 = vmatprep.subr.mxu0 0.0
      %226 = vmatpush1.msra.mxu0 0.0
      %227 = vmatprep.subr.mxu0 0.0
      %228 = vmatpush1.msra.mxu0 0.0
      %229 = vmatprep.subr.mxu0 0.0
      %230 = vmatpush1.msra.mxu0 0.0
      %231 = vmatprep.subr.mxu0 0.0
      %232 = vmatpush1.msra.mxu0 0.0
      %233 = vmatprep.subr.mxu0 0.0
      %234 = vmatpush1.msra.mxu0 0.0
      %235 = vmatprep.subr.mxu0 0.0
      %236 = vmatpush1.msra.mxu0 0.0
      %237 = vmatprep.subr.mxu0 0.0
      %238 = vmatpush1.msra.mxu0 0.0
      %239 = vmatprep.subr.mxu0 0.0
      %240 = vmatpush1.msra.mxu0 0.0
      %241 = vmatprep.subr.mxu0 0.0
      %242 = vmatpush1.msra.mxu0 0.0
      %243 = vmatprep.subr.mxu0 0.0
      %244 = vmatpush1.msra.mxu0 0.0
      %245 = vmatprep.subr.mxu0 0.0
      %246 = vmatpush1.msra.mxu0 0.0
      %247 = vmatprep.subr.mxu0 0.0
      %248 = vmatpush1.msra.mxu0 0.0
      %249 = vmatprep.subr.mxu0 0.0
      %250 = vmatpush1.msra.mxu0 0.0
      %251 = vmatprep.subr.mxu0 0.0
      %252 = vmatpush1.msra.mxu0 0.0
      %253 = vmatprep.subr.mxu0 0.0
      %254 = vmatpush1.msra.mxu0 0.0
      %255 = vmatprep.mubr.f32.mxu0 0.0
      %256 = vmatmul.mubr.f32.gmra.mrb[0].mxu0 %v189
      %v257 = vpop.f32.mrb[0].mxu0
      %v258 = vadd.f32 %v185, %v257
      %v259 = vpop.f32.mrb[0].mxu0
      %260 = vdwg.mxu0
      %v261 = vmax.f32 %v258, 0.0
      %v262 = vld [vmem:[#allocation8] sm:$0xff]
      %v263 = vld [vmem:[#allocation8 + $0x8] sm:$0xff]
      %v264 = vld [vmem:[#allocation8 + $0x10] sm:$0xff]
      %v265 = vld [vmem:[#allocation8 + $0x18] sm:$0xff]
      %v266 = vld [vmem:[#allocation8 + $0x20] sm:$0xff]
      %v267 = vld [vmem:[#allocation8 + $0x28] sm:$0xff]
      %v268 = vld [vmem:[#allocation8 + $0x30] sm:$0xff]
      %v269 = vld [vmem:[#allocation8 + $0x38] sm:$0xff]
      %v270 = vld [vmem:[#allocation8 + $0x40] sm:$0xff]
      %v271 = vld [vmem:[#allocation8 + $0x48] sm:$0xff]
      %v272 = vld [vmem:[#allocation8 + $0x50] sm:$0xff]
      %v273 = vld [vmem:[#allocation8 + $0x58] sm:$0xff]
      %v274 = vld [vmem:[#allocation8 + $0x60] sm:$0xff]
      %v275 = vld [vmem:[#allocation8 + $0x68] sm:$0xff]
      %v276 = vld [vmem:[#allocation8 + $0x70] sm:$0xff]
      %v277 = vld [vmem:[#allocation8 + $0x78] sm:$0xff]
      %v278 = vld [vmem:[%s4] sm:$0x1]
      %v280 = vlaneseq
      %v281 = vshrl.u32 %v280, 7
      %v282 = vsub.s32 0, %v281
      %v283 = vrot.slane %v278, %v282
      %285 = vmatprep.subr.mxu0 0.0
      %286 = vmatpush1.msra.mxu0 %v262
      %287 = vmatprep.subr.mxu0 0.0
      %288 = vmatpush1.msra.mxu0 %v263
      %289 = vmatprep.subr.mxu0 0.0
      %290 = vmatpush1.msra.mxu0 %v264
      %291 = vmatprep.subr.mxu0 0.0
      %292 = vmatpush1.msra.mxu0 %v265
      %293 = vmatprep.subr.mxu0 0.0
      %294 = vmatpush1.msra.mxu0 %v266
      %295 = vmatprep.subr.mxu0 0.0
      %296 = vmatpush1.msra.mxu0 %v267
      %297 = vmatprep.subr.mxu0 0.0
      %298 = vmatpush1.msra.mxu0 %v268
      %299 = vmatprep.subr.mxu0 0.0
      %300 = vmatpush1.msra.mxu0 %v269
      %301 = vmatprep.subr.mxu0 0.0
      %302 = vmatpush1.msra.mxu0 %v270
      %303 = vmatprep.subr.mxu0 0.0
      %304 = vmatpush1.msra.mxu0 %v271
      %305 = vmatprep.subr.mxu0 0.0
      %306 = vmatpush1.msra.mxu0 %v272
      %307 = vmatprep.subr.mxu0 0.0
      %308 = vmatpush1.msra.mxu0 %v273
      %309 = vmatprep.subr.mxu0 0.0
      %310 = vmatpush1.msra.mxu0 %v274
      %311 = vmatprep.subr.mxu0 0.0
      %312 = vmatpush1.msra.mxu0 %v275
      %313 = vmatprep.subr.mxu0 0.0
      %314 = vmatpush1.msra.mxu0 %v276
      %315 = vmatprep.subr.mxu0 0.0
      %316 = vmatpush1.msra.mxu0 %v277
      %317 = vmatprep.subr.mxu0 0.0
      %318 = vmatpush1.msra.mxu0 0.0
      %319 = vmatprep.subr.mxu0 0.0
      %320 = vmatpush1.msra.mxu0 0.0
      %321 = vmatprep.subr.mxu0 0.0
      %322 = vmatpush1.msra.mxu0 0.0
      %323 = vmatprep.subr.mxu0 0.0
      %324 = vmatpush1.msra.mxu0 0.0
      %325 = vmatprep.subr.mxu0 0.0
      %326 = vmatpush1.msra.mxu0 0.0
      %327 = vmatprep.subr.mxu0 0.0
      %328 = vmatpush1.msra.mxu0 0.0
      %329 = vmatprep.subr.mxu0 0.0
      %330 = vmatpush1.msra.mxu0 0.0
      %331 = vmatprep.subr.mxu0 0.0
      %332 = vmatpush1.msra.mxu0 0.0
      %333 = vmatprep.subr.mxu0 0.0
      %334 = vmatpush1.msra.mxu0 0.0
      %335 = vmatprep.subr.mxu0 0.0
      %336 = vmatpush1.msra.mxu0 0.0
      %337 = vmatprep.subr.mxu0 0.0
      %338 = vmatpush1.msra.mxu0 0.0
      %339 = vmatprep.subr.mxu0 0.0
      %340 = vmatpush1.msra.mxu0 0.0
      %341 = vmatprep.subr.mxu0 0.0
      %342 = vmatpush1.msra.mxu0 0.0
      %343 = vmatprep.subr.mxu0 0.0
      %344 = vmatpush1.msra.mxu0 0.0
      %345 = vmatprep.subr.mxu0 0.0
      %346 = vmatpush1.msra.mxu0 0.0
      %347 = vmatprep.subr.mxu0 0.0
      %348 = vmatpush1.msra.mxu0 0.0
      %349 = vmatprep.mubr.f32.mxu0 0.0
      %350 = vmatmul.mubr.f32.gmra.mrb[0].mxu0 %v261
      %v351 = vpop.f32.mrb[0].mxu0
      %v352 = vadd.f32 %v283, %v351
      %v353 = vpop.f32.mrb[0].mxu0
      %354 = vdwg.mxu0
      %v355 = vmax.f32 %v352, 0.0
      %356 = vst [vmem:[#allocation9] sm:$0xff] %v355
    $region41: #{tpu_custom_call.1} parent=1 // pred_fallthru
      _
    // Predicated region
    $region42: #{tpu_custom_call.1} parent=1 // pred_check
      _
    $region43: #{tpu_custom_call.1} parent=1 // pred_check_branch
      %358 = sbr.rel (0) target = $region45
    $region44: #{tpu_custom_call.1} parent=1 // pred_region
      %s360 = ssub.s32 128, 128
      %361 = vsyncadd [#allocation5], %s360
      %s363 = sshll.u32 [#allocation9], 4
      %s364 = int_to_ptr.vmem [resolvable:$true] %s363
      %366 = dma.vmem_to_hbm [thread:$0]  %s364, 128, %s5, [#allocation5]
    $region45: #{tpu_custom_call.1} parent=1 // pred_fallthru
      _
    // Predicated region
    $region46: #{tpu_custom_call.1} parent=1 // pred_check
      _
    $region47: #{tpu_custom_call.1} parent=1 // pred_check_branch
      %368 = sbr.rel (0) target = $region49
    $region48: #{tpu_custom_call.1} parent=1 // pred_region
      %369 = dma.done [#allocation5], 128
    $region49: #{tpu_custom_call.1} parent=1 // pred_fallthru
      _
    %370 = vsyncpa [#allocation4], 1
    %371 = vsyncpa [#allocation7], 1
    %372 = vsyncpa [#allocation5], 1

</llo_original>
